<compile_context>
chip_gen: v6e
topology: v6e:2x2x1
jax: 0.10.0
libtpu: 0.0.40
codegen_flags: <defaults>
</compile_context>

<pallas_src>
import functools

import jax
import jax.numpy as jnp
from jax.experimental import pallas as pl
from jax.experimental.pallas import tpu as pltpu

EPS = 1e-5
_MIB = 1024 * 1024


# ---------------------------------------------------------------------------
# Helpers
# ---------------------------------------------------------------------------
def _vmem_capacity_bytes():
    try:
        return int(pltpu.get_tpu_info().vmem_capacity_bytes)
    except Exception:
        return 64 * _MIB  # conservative (v7x per-core VMEM)


def _choose_tiles(n_rows, C, HW, itemsize, target_bytes=2 * _MIB):
    """Pick (batch_tile, spatial_tile) dividing (n_rows, HW) exactly.

    Spatial tile is a multiple of 128 (lane-dense) whenever HW allows it,
    otherwise the full spatial dim (always legal as a BlockSpec dim).
    """
    if HW % 128 == 0:
        ts = 128
        for cand in range(128, HW + 1, 128):
            if HW % cand == 0 and cand * C * itemsize <= target_bytes:
                ts = cand
    else:
        ts = HW
    tb = 1
    for cand in range(1, n_rows + 1):
        if n_rows % cand == 0 and cand * C * ts * itemsize <= target_bytes:
            tb = cand
    return tb, ts


def _compiler_params(semantics, block_bytes_total):
    """Explicit scoped-VMEM budget sized to the chosen blocks (double-buffered)."""
    cap = _vmem_capacity_bytes()
    need = 2 * block_bytes_total + 2 * _MIB
    limit = int(min(max(need, 32 * _MIB), max(32 * _MIB, (cap * 3) // 4)))
    return pltpu.CompilerParams(dimension_semantics=semantics,
                                vmem_limit_bytes=limit)


# ---------------------------------------------------------------------------
# Kernels.  Blocks are (1, TB, C, TS): channels on sublanes, spatial on lanes.
# ---------------------------------------------------------------------------
def _stats_kernel(x_ref, sum_ref, sq_ref):
    """Accumulate per-channel sum and sum-of-squares (f32) for one domain."""
    first = jnp.logical_and(pl.program_id(1) == 0, pl.program_id(2) == 0)

    @pl.when(first)
    def _():
        sum_ref[...] = jnp.zeros_like(sum_ref)
        sq_ref[...] = jnp.zeros_like(sq_ref)

    x = x_ref[0].astype(jnp.float32)                              # (TB, C, TS)
    # Lane (spatial) reduction on the XLU, then vreg adds over the batch tile.
    ps = jnp.sum(jnp.sum(x, axis=2, keepdims=True), axis=0)       # (C, 1)
    pq = jnp.sum(jnp.sum(x * x, axis=2, keepdims=True), axis=0)   # (C, 1)
    sum_ref[0] += ps
    sq_ref[0] += pq


def _norm_kernel(x_ref, scale_ref, shift_ref, o_ref):
    """y = x * scale + shift with per-channel (C, 1) scale/shift."""
    x = x_ref[0].astype(jnp.float32)                              # (TB, C, TS)
    o_ref[0] = (x * scale_ref[0] + shift_ref[0]).astype(o_ref.dtype)


def _fused_kernel(x_ref, w_ref, b_ref, o_ref, *, eps):
    """Whole-domain-in-VMEM fast path: stats + normalize in one shot."""
    x = x_ref[0].astype(jnp.float32)                              # (n_per, C, HW)
    cnt = x.shape[0] * x.shape[2]
    mean = jnp.sum(jnp.sum(x, axis=2, keepdims=True), axis=0) / cnt      # (C, 1)
    xc = x - mean
    var = jnp.sum(jnp.sum(xc * xc, axis=2, keepdims=True), axis=0) / cnt  # (C, 1)
    scale = w_ref[0].astype(jnp.float32) * jax.lax.rsqrt(var + eps)       # (C, 1)
    beta = b_ref[0].astype(jnp.float32)
    o_ref[0] = (xc * scale + beta).astype(o_ref.dtype)


# ---------------------------------------------------------------------------
# Wrappers
# ---------------------------------------------------------------------------
def ds_batch_norm_train(x_nchw, weight, bias, num_domains, eps=EPS,
                        force_two_pass=False):
    """Training forward. x_nchw: (B, C, H, W); weight/bias: (num_domains, C)."""
    B, C, H, W = x_nchw.shape
    assert B % num_domains == 0, "the batch size should be times of BN groups"
    n_per = B // num_domains
    HW = H * W
    itemsize = jnp.dtype(x_nchw.dtype).itemsize

    # Free reshapes only (no transpose): NCHW -> (D, n_per, C, H*W).
    x4 = x_nchw.reshape(num_domains, n_per, C, HW)
    w3 = weight.astype(jnp.float32).reshape(num_domains, C, 1)
    b3 = bias.astype(jnp.float32).reshape(num_domains, C, 1)

    cap = _vmem_capacity_bytes()
    slab_io = n_per * C * HW * itemsize
    slab_f32 = n_per * C * HW * 4
    fused_need = 4 * slab_io + 3 * slab_f32   # dbl-buffered in/out + f32 working set
    use_fused = (not force_two_pass) and (fused_need < cap // 2)

    if use_fused:
        out = pl.pallas_call(
            functools.partial(_fused_kernel, eps=eps),
            out_shape=jax.ShapeDtypeStruct(x4.shape, x_nchw.dtype),
            grid_spec=pltpu.PrefetchScalarGridSpec(
                num_scalar_prefetch=0,
                grid=(num_domains,),
                in_specs=[
                    pl.BlockSpec((1, n_per, C, HW), lambda d: (d, 0, 0, 0)),
                    pl.BlockSpec((1, C, 1), lambda d: (d, 0, 0)),
                    pl.BlockSpec((1, C, 1), lambda d: (d, 0, 0)),
                ],
                out_specs=pl.BlockSpec((1, n_per, C, HW), lambda d: (d, 0, 0, 0)),
            ),
            compiler_params=_compiler_params(
                ("parallel",), 2 * slab_io + slab_f32),
        )(x4, w3, b3)
        return out.reshape(B, C, H, W)

    # ---- tiled two-pass path (general / large-shape path) ----
    tb, ts = _choose_tiles(n_per, C, HW, itemsize)
    gb, gs = n_per // tb, HW // ts
    block_bytes = tb * C * ts * itemsize

    sums, sqs = pl.pallas_call(
        _stats_kernel,
        out_shape=(jax.ShapeDtypeStruct((num_domains, C, 1), jnp.float32),
                   jax.ShapeDtypeStruct((num_domains, C, 1), jnp.float32)),
        grid_spec=pltpu.PrefetchScalarGridSpec(
            num_scalar_prefetch=0,
            grid=(num_domains, gb, gs),
            in_specs=[pl.BlockSpec((1, tb, C, ts), lambda d, b, s: (d, b, 0, s))],
            out_specs=(pl.BlockSpec((1, C, 1), lambda d, b, s: (d, 0, 0)),
                       pl.BlockSpec((1, C, 1), lambda d, b, s: (d, 0, 0))),
        ),
        compiler_params=_compiler_params(
            ("parallel", "arbitrary", "arbitrary"), block_bytes),
    )(x4)

    # Tiny (num_domains, C) wrapper math: fold BN into per-channel scale/shift.
    cnt = float(n_per * HW)
    mean = sums / cnt
    # E[x^2] - mean^2 with f32 accumulators (standard fused-BN practice);
    # clamp guards rounding-induced tiny negatives.
    var = jnp.maximum(sqs / cnt - mean * mean, 0.0)
    scale = w3 * jax.lax.rsqrt(var + eps)              # (D, C, 1) f32
    shift = b3 - mean * scale                          # (D, C, 1) f32

    out = pl.pallas_call(
        _norm_kernel,
        out_shape=jax.ShapeDtypeStruct(x4.shape, x_nchw.dtype),
        grid_spec=pltpu.PrefetchScalarGridSpec(
            num_scalar_prefetch=0,
            grid=(num_domains, gb, gs),
            in_specs=[
                pl.BlockSpec((1, tb, C, ts), lambda d, b, s: (d, b, 0, s)),
                pl.BlockSpec((1, C, 1), lambda d, b, s: (d, 0, 0)),
                pl.BlockSpec((1, C, 1), lambda d, b, s: (d, 0, 0)),
            ],
            out_specs=pl.BlockSpec((1, tb, C, ts), lambda d, b, s: (d, b, 0, s)),
        ),
        compiler_params=_compiler_params(
            ("parallel", "parallel", "parallel"), 2 * block_bytes),
    )(x4, scale, shift)
    return out.reshape(B, C, H, W)
    # TODO(synk): running_mean/running_var updates (momentum=0.1) are a training
    # side-effect of nn.BatchNorm2d and do not affect the forward output; omitted.


def ds_batch_norm_eval(x_nchw, weight, bias, running_mean, running_var,
                       num_domains, target_bn_idx=-1, eps=EPS):
    """Eval forward: applies dsbn[target_bn_idx] with its running stats."""
    B, C, H, W = x_nchw.shape
    HW = H * W
    idx = target_bn_idx % num_domains
    itemsize = jnp.dtype(x_nchw.dtype).itemsize

    # Fold running stats + affine into per-channel scale/shift (tiny C-sized op).
    rv = running_var[idx].astype(jnp.float32)
    rm = running_mean[idx].astype(jnp.float32)
    scale = weight[idx].astype(jnp.float32) * jax.lax.rsqrt(rv + eps)
    shift = bias[idx].astype(jnp.float32) - rm * scale
    scale3 = scale.reshape(1, C, 1)
    shift3 = shift.reshape(1, C, 1)

    x4 = x_nchw.reshape(1, B, C, HW)                   # free reshape, no transpose
    tb, ts = _choose_tiles(B, C, HW, itemsize)
    gb, gs = B // tb, HW // ts
    block_bytes = tb * C * ts * itemsize

    out = pl.pallas_call(
        _norm_kernel,
        out_shape=jax.ShapeDtypeStruct(x4.shape, x_nchw.dtype),
        grid_spec=pltpu.PrefetchScalarGridSpec(
            num_scalar_prefetch=0,
            grid=(1, gb, gs),
            in_specs=[
                pl.BlockSpec((1, tb, C, ts), lambda d, b, s: (d, b, 0, s)),
                pl.BlockSpec((1, C, 1), lambda d, b, s: (d, 0, 0)),
                pl.BlockSpec((1, C, 1), lambda d, b, s: (d, 0, 0)),
            ],
            out_specs=pl.BlockSpec((1, tb, C, ts), lambda d, b, s: (d, b, 0, s)),
        ),
        compiler_params=_compiler_params(
            ("parallel", "parallel", "parallel"), 2 * block_bytes),
    )(x4, scale3, shift3)
    return out.reshape(B, C, H, W)


# ---------------------------------------------------------------------------
# Pure-JAX reference (mirrors PyTorch BatchNorm2d semantics) for verification.
# ---------------------------------------------------------------------------
def _ref_train(x_nchw, weight, bias, num_domains):
    B = x_nchw.shape[0]
    n_per = B // num_domains
    outs = []
    for d in range(num_domains):
        sub = x_nchw[d * n_per:(d + 1) * n_per].astype(jnp.float32)
        mean = jnp.mean(sub, axis=(0, 2, 3), keepdims=True)
        var = jnp.mean((sub - mean) ** 2, axis=(0, 2, 3), keepdims=True)
        g = weight[d].reshape(1, -1, 1, 1)
        b = bias[d].reshape(1, -1, 1, 1)
        outs.append((sub - mean) / jnp.sqrt(var + EPS) * g + b)
    return jnp.concatenate(outs, axis=0).astype(x_nchw.dtype)


if __name__ == "__main__":
    key = jax.random.PRNGKey(0)
    num_domains = 2
    target_bn_idx = -1
    B, C, H, W = 4, 4, 16, 16          # batch must be a multiple of num_domains

    k_x, k_w, k_b, k_rm, k_rv = jax.random.split(key, 5)
    x = jax.random.normal(k_x, (B, C, H, W), dtype=jnp.float32)
    weight = 1.0 + 0.1 * jax.random.normal(k_w, (num_domains, C), jnp.float32)
    bias = 0.1 * jax.random.normal(k_b, (num_domains, C), jnp.float32)
    running_mean = 0.05 * jax.random.normal(k_rm, (num_domains, C), jnp.float32)
    running_var = 1.0 + 0.05 * jax.random.uniform(k_rv, (num_domains, C), jnp.float32)

    ref = _ref_train(x, weight, bias, num_domains)

    # Fused in-VMEM fast path (small per-domain slabs).
    y_fused = jax.block_until_ready(
        ds_batch_norm_train(x, weight, bias, num_domains))
    assert jnp.allclose(y_fused, ref, atol=1e-4, rtol=1e-4), "fused train mismatch"

    # Tiled two-pass path (the general / large-shape path).
    y_tiled = jax.block_until_ready(
        ds_batch_norm_train(x, weight, bias, num_domains, force_two_pass=True))
    assert jnp.allclose(y_tiled, ref, atol=1e-4, rtol=1e-4), "tiled train mismatch"

    # Eval path (running stats of dsbn[target_bn_idx]).
    y_eval = jax.block_until_ready(
        ds_batch_norm_eval(x, weight, bias, running_mean, running_var,
                           num_domains, target_bn_idx))
    idx = target_bn_idx % num_domains
    ref_eval = ((x - running_mean[idx].reshape(1, C, 1, 1))
                / jnp.sqrt(running_var[idx].reshape(1, C, 1, 1) + EPS)
                * weight[idx].reshape(1, C, 1, 1)
                + bias[idx].reshape(1, C, 1, 1))
    assert jnp.allclose(y_eval, ref_eval, atol=1e-4, rtol=1e-4), "eval mismatch"

    print("KERNEL_OK")
</pallas_src>

<mosaic_0001>
module attributes {stable_mosaic.version = 11 : i64} {
  func.func @_fused_kernel(%arg0: i32, %arg1: memref<1x2x4x256xf32, #tpu.memory_space<vmem>>, %arg2: memref<1x4x1xf32, #tpu.memory_space<vmem>>, %arg3: memref<1x4x1xf32, #tpu.memory_space<vmem>>, %arg4: memref<1x2x4x256xf32, #tpu.memory_space<vmem>>) attributes {dimension_semantics = [#tpu.dimension_semantics<parallel>], iteration_bounds = array<i64: 2>, scalar_prefetch = 0 : i64, scratch_operands = 0 : i64, tpu.core_type = #tpu.core_type<tc>, window_params = [{transform_indices = @transform_0, window_bounds = array<i64: 1, 2, 4, 256>}, {transform_indices = @transform_1, window_bounds = array<i64: 1, 4, 1>}, {transform_indices = @transform_2, window_bounds = array<i64: 1, 4, 1>}, {transform_indices = @transform_3, window_bounds = array<i64: 1, 2, 4, 256>}]} {
    %c0 = arith.constant 0 : index
    %c0_0 = arith.constant 0 : index
    %c0_1 = arith.constant 0 : index
    %c0_2 = arith.constant 0 : index
    %0 = vector.load %arg1[%c0, %c0_0, %c0_1, %c0_2] : memref<1x2x4x256xf32, #tpu.memory_space<vmem>>, vector<1x2x4x256xf32>
    %1 = vector.shape_cast %0 : vector<1x2x4x256xf32> to vector<2x4x256xf32>
    %cst = arith.constant dense<0.000000e+00> : vector<2x4xf32>
    %2 = vector.multi_reduction <add>, %1, %cst [2] : vector<2x4x256xf32> to vector<2x4xf32>
    %3 = vector.shape_cast %2 : vector<2x4xf32> to vector<2x4x1xf32>
    %cst_3 = arith.constant dense<0.000000e+00> : vector<4x1xf32>
    %4 = vector.multi_reduction <add>, %3, %cst_3 [0] : vector<2x4x1xf32> to vector<4x1xf32>
    %cst_4 = arith.constant 5.120000e+02 : f32
    %5 = vector.broadcast %cst_4 : f32 to vector<4x1xf32>
    %6 = arith.divf %4, %5 : vector<4x1xf32>
    %7 = vector.shape_cast %6 : vector<4x1xf32> to vector<1x4x1xf32>
    %8 = vector.broadcast %7 : vector<1x4x1xf32> to vector<2x4x256xf32>
    %9 = arith.subf %1, %8 : vector<2x4x256xf32>
    %10 = arith.mulf %9, %9 : vector<2x4x256xf32>
    %cst_5 = arith.constant dense<0.000000e+00> : vector<2x4xf32>
    %11 = vector.multi_reduction <add>, %10, %cst_5 [2] : vector<2x4x256xf32> to vector<2x4xf32>
    %12 = vector.shape_cast %11 : vector<2x4xf32> to vector<2x4x1xf32>
    %cst_6 = arith.constant dense<0.000000e+00> : vector<4x1xf32>
    %13 = vector.multi_reduction <add>, %12, %cst_6 [0] : vector<2x4x1xf32> to vector<4x1xf32>
    %cst_7 = arith.constant 5.120000e+02 : f32
    %14 = vector.broadcast %cst_7 : f32 to vector<4x1xf32>
    %15 = arith.divf %13, %14 : vector<4x1xf32>
    %c0_8 = arith.constant 0 : index
    %c0_9 = arith.constant 0 : index
    %c0_10 = arith.constant 0 : index
    %16 = vector.load %arg2[%c0_8, %c0_9, %c0_10] : memref<1x4x1xf32, #tpu.memory_space<vmem>>, vector<1x4x1xf32>
    %17 = vector.shape_cast %16 : vector<1x4x1xf32> to vector<4x1xf32>
    %cst_11 = arith.constant 9.99999974E-6 : f32
    %18 = vector.broadcast %cst_11 : f32 to vector<4x1xf32>
    %19 = arith.addf %15, %18 : vector<4x1xf32>
    %20 = math.rsqrt %19 : vector<4x1xf32>
    %21 = arith.mulf %17, %20 : vector<4x1xf32>
    %c0_12 = arith.constant 0 : index
    %c0_13 = arith.constant 0 : index
    %c0_14 = arith.constant 0 : index
    %22 = vector.load %arg3[%c0_12, %c0_13, %c0_14] : memref<1x4x1xf32, #tpu.memory_space<vmem>>, vector<1x4x1xf32>
    %23 = vector.shape_cast %22 : vector<1x4x1xf32> to vector<4x1xf32>
    %24 = vector.shape_cast %21 : vector<4x1xf32> to vector<1x4x1xf32>
    %25 = vector.broadcast %24 : vector<1x4x1xf32> to vector<2x4x256xf32>
    %26 = arith.mulf %9, %25 : vector<2x4x256xf32>
    %27 = vector.shape_cast %23 : vector<4x1xf32> to vector<1x4x1xf32>
    %28 = vector.broadcast %27 : vector<1x4x1xf32> to vector<2x4x256xf32>
    %29 = arith.addf %26, %28 : vector<2x4x256xf32>
    %c0_15 = arith.constant 0 : index
    %c0_16 = arith.constant 0 : index
    %c0_17 = arith.constant 0 : index
    %c0_18 = arith.constant 0 : index
    %30 = vector.load %arg4[%c0_15, %c0_16, %c0_17, %c0_18] : memref<1x2x4x256xf32, #tpu.memory_space<vmem>>, vector<1x2x4x256xf32>
    %31 = vector.shape_cast %30 : vector<1x2x4x256xf32> to vector<2x4x256xf32>
    %32 = vector.shape_cast %29 : vector<2x4x256xf32> to vector<1x2x4x256xf32>
    tpu.vector_store %arg4[%c0_15, %c0_16, %c0_17, %c0_18], %32 {strides = array<i32>} : memref<1x2x4x256xf32, #tpu.memory_space<vmem>>, vector<1x2x4x256xf32>,
    return
  }
  func.func @transform_0(%arg0: i32) -> (i32, i32, i32, i32) {
    %c0_i32 = arith.constant 0 : i32
    %c0_i32_0 = arith.constant 0 : i32
    %c0_i32_1 = arith.constant 0 : i32
    %c0_i32_2 = arith.constant 0 : i32
    return %arg0, %c0_i32, %c0_i32_0, %c0_i32_1 : i32, i32, i32, i32
  }
  func.func @transform_1(%arg0: i32) -> (i32, i32, i32) {
    %c0_i32 = arith.constant 0 : i32
    %c0_i32_0 = arith.constant 0 : i32
    %c0_i32_1 = arith.constant 0 : i32
    return %arg0, %c0_i32, %c0_i32_0 : i32, i32, i32
  }
  func.func @transform_2(%arg0: i32) -> (i32, i32, i32) {
    %c0_i32 = arith.constant 0 : i32
    %c0_i32_0 = arith.constant 0 : i32
    %c0_i32_1 = arith.constant 0 : i32
    return %arg0, %c0_i32, %c0_i32_0 : i32, i32, i32
  }
  func.func @transform_3(%arg0: i32) -> (i32, i32, i32, i32) {
    %c0_i32 = arith.constant 0 : i32
    %c0_i32_0 = arith.constant 0 : i32
    %c0_i32_1 = arith.constant 0 : i32
    %c0_i32_2 = arith.constant 0 : i32
    return %arg0, %c0_i32, %c0_i32_0, %c0_i32_1 : i32, i32, i32, i32
  }
}

</mosaic_0001>

<llo_original>
// kernel: tpu_custom_call.1
$region0: #{tpu_custom_call.1}
  #allocation0 [shape = 'u32[]', space=smem, size = 0x4, offset = 0x4, fixed_abs, tag = 'smem constant byte address 0x4 - core index']
  #allocation1 [shape = 'u32[144,128]{1,0:T(1,128)}', space=vmem, size = 0x12000, scoped, tag = 'internal scratch']
  %s0 = inlined_call_operand.hbm [shape: f32[2,2,4,256], index: 0, kind: input, shape index: {}]
  %s1 = inlined_call_operand.vmem [shape: f32[2,4,1], index: 1, kind: input, shape index: {}]
  %s2 = inlined_call_operand.vmem [shape: f32[2,4,1], index: 2, kind: input, shape index: {}]
  %s3 = inlined_call_operand.hbm [shape: f32[2,2,4,256], index: 3, kind: output, shape index: {}]
  %s4 = sld [smem:[#allocation0]]
  $region49: #{tpu_custom_call.1} parent=0
    _
  %s6 = ssub.s32 1, %s4
  %s7 = scalar_select 0, %s6, %s4
  $region1: #{tpu_custom_call.1} parent=0
    #allocation2 [shape = 'u8[16384]{0}', space=vmem, size = 0x4000, scoped, tag = 'input window, operand 0']
    #allocation3 [shape = 's32[2]{0}', space=sflag, size = 0x8, scoped, tag = 'scoped memory for tpu_custom_call.1']
    #allocation4 [shape = 's32[2]{0}', space=sflag, size = 0x8, scoped, tag = 'scoped memory for tpu_custom_call.1']
    #allocation5 [shape = 'u8[16384]{0}', space=vmem, size = 0x4000, scoped, tag = 'output window, operand 0']
    %8 = vsyncpa [#allocation3], 0
    %s9 = scalar_lea.sflag [#allocation3], 1
    %10 = vsyncpa %s9, 0
    %11 = vsyncpa [#allocation4], 0
    %s12 = scalar_lea.sflag [#allocation4], 1
    %13 = vsyncpa %s12, 0
    loop: start=0, step=1, limit=4
    $region2: #{tpu_custom_call.1} parent=1 // loop_pre_header
      _
    $region3: #{tpu_custom_call.1} parent=1 // loop_header
      %s15 = sphi 0, %s19
      %p16 = scmp.ge.s32.totalorder %s15, 4
      %s25 = sphi 0, %s27
      %s28 = sphi 0, %s25
      %s29 = sphi 0, %s28
      %s45 = sphi 0, %s29
      %s51 = sphi 0, %s53
      %s54 = sphi 0, %s51
      %s55 = sphi 0, %s54
      %s71 = sphi 0, %s55
      %s77 = sphi 0, %s79
      %s80 = sphi 0, %s77
      %s81 = sphi 0, %s80
      %s97 = sphi 0, %s81
      %s103 = sphi 0, %s105
      %s106 = sphi 0, %s103
      %s107 = sphi 0, %s106
      %s123 = sphi 0, %s107
    $region4: #{tpu_custom_call.1} parent=1 // loop_header_branch
      %18 = sbr.rel (%p16) target = $region8
    $region5: #{tpu_custom_call.1} parent=1 // loop_body
      %s20 = ssub.s32 %s15, 1
      %s21 = ssub.s32 %s15, 2
      %s22 = sadd.s32 %s15, 1
      %s23 = ssub.s32 %s15, %s22
      %p24 = scmp.eq.s32.totalorder %s23, 0
      %s26 = sadd.s32 %s25, 1
      %s27 = scalar_select %p24, %s25, %s26
      %p30 = pneg %p24
      %p31 = scmp.eq.s32.totalorder %s15, 1
      %p32 = por %p30, %p31
      %p33 = scmp.ne.s32.totalorder %s25, %s28
      %p34 = scmp.eq.s32.totalorder %s15, 0
      %p35 = por %p33, %p34
      %p36 = scmp.ne.s32.totalorder %s25, %s28
      %p37 = scmp.eq.s32.totalorder %s20, 1
      %p38 = por %p36, %p37
      %p39 = scmp.ne.s32.totalorder %s28, %s29
      %p40 = scmp.eq.s32.totalorder %s20, 0
      %p41 = por %p39, %p40
      %p42 = scmp.ne.s32.totalorder %s28, %s29
      %p43 = scmp.eq.s32.totalorder %s21, 1
      %p44 = por %p42, %p43
      %p46 = scmp.ne.s32.totalorder %s29, %s45
      %p47 = scmp.eq.s32.totalorder %s21, 0
      %p48 = por %p46, %p47
      %s49 = ssub.s32 %s15, %s22
      %p50 = scmp.eq.s32.totalorder %s49, 0
      %s52 = sadd.s32 %s51, 1
      %s53 = scalar_select %p50, %s51, %s52
      %p56 = pneg %p50
      %p57 = scmp.eq.s32.totalorder %s15, 1
      %p58 = por %p56, %p57
      %p59 = scmp.ne.s32.totalorder %s51, %s54
      %p60 = scmp.eq.s32.totalorder %s15, 0
      %p61 = por %p59, %p60
      %p62 = scmp.ne.s32.totalorder %s51, %s54
      %p63 = scmp.eq.s32.totalorder %s20, 1
      %p64 = por %p62, %p63
      %p65 = scmp.ne.s32.totalorder %s54, %s55
      %p66 = scmp.eq.s32.totalorder %s20, 0
      %p67 = por %p65, %p66
      %p68 = scmp.ne.s32.totalorder %s54, %s55
      %p69 = scmp.eq.s32.totalorder %s21, 1
      %p70 = por %p68, %p69
      %p72 = scmp.ne.s32.totalorder %s55, %s71
      %p73 = scmp.eq.s32.totalorder %s21, 0
      %p74 = por %p72, %p73
      %s75 = ssub.s32 %s15, %s22
      %p76 = scmp.eq.s32.totalorder %s75, 0
      %s78 = sadd.s32 %s77, 1
      %s79 = scalar_select %p76, %s77, %s78
      %p82 = pneg %p76
      %p83 = scmp.eq.s32.totalorder %s15, 1
      %p84 = por %p82, %p83
      %p85 = scmp.ne.s32.totalorder %s77, %s80
      %p86 = scmp.eq.s32.totalorder %s15, 0
      %p87 = por %p85, %p86
      %p88 = scmp.ne.s32.totalorder %s77, %s80
      %p89 = scmp.eq.s32.totalorder %s20, 1
      %p90 = por %p88, %p89
      %p91 = scmp.ne.s32.totalorder %s80, %s81
      %p92 = scmp.eq.s32.totalorder %s20, 0
      %p93 = por %p91, %p92
      %p94 = scmp.ne.s32.totalorder %s80, %s81
      %p95 = scmp.eq.s32.totalorder %s21, 1
      %p96 = por %p94, %p95
      %p98 = scmp.ne.s32.totalorder %s81, %s97
      %p99 = scmp.eq.s32.totalorder %s21, 0
      %p100 = por %p98, %p99
      %s101 = ssub.s32 %s15, %s22
      %p102 = scmp.eq.s32.totalorder %s101, 0
      %s104 = sadd.s32 %s103, 1
      %s105 = scalar_select %p102, %s103, %s104
      %p108 = pneg %p102
      %p109 = scmp.eq.s32.totalorder %s15, 1
      %p110 = por %p108, %p109
      %p111 = scmp.ne.s32.totalorder %s103, %s106
      %p112 = scmp.eq.s32.totalorder %s15, 0
      %p113 = por %p111, %p112
      %p114 = scmp.ne.s32.totalorder %s103, %s106
      %p115 = scmp.eq.s32.totalorder %s20, 1
      %p116 = por %p114, %p115
      %p117 = scmp.ne.s32.totalorder %s106, %s107
      %p118 = scmp.eq.s32.totalorder %s20, 0
      %p119 = por %p117, %p118
      %p120 = scmp.ne.s32.totalorder %s106, %s107
      %p121 = scmp.eq.s32.totalorder %s21, 1
      %p122 = por %p120, %p121
      %p124 = scmp.ne.s32.totalorder %s107, %s123
      %p125 = scmp.eq.s32.totalorder %s21, 0
      %p126 = por %p124, %p125
      %p127 = scmp.le.s32.totalorder 1, %s15
      %p128 = scmp.lt.s32.totalorder %s15, 3
      %p129 = pnand %p127, %p128
      %p130 = pneg %p129
      // Predicated region
      $region9: #{tpu_custom_call.1} parent=5 // pred_check
        _
      $region10: #{tpu_custom_call.1} parent=5 // pred_check_branch
        %132 = sbr.rel (%p129) target = $region12
      $region11: #{tpu_custom_call.1} parent=5 // pred_region
        %s133 = ssub.s32 %s15, 1
      $region12: #{tpu_custom_call.1} parent=5 // pred_fallthru
        _
      %p134 = scmp.lt.s32.totalorder %s15, 2
      // Predicated region
      $region13: #{tpu_custom_call.1} parent=5 // pred_check
        %p135 = pneg %p134
      $region14: #{tpu_custom_call.1} parent=5 // pred_check_branch
        %137 = sbr.rel (%p135) target = $region16
      $region15: #{tpu_custom_call.1} parent=5 // pred_region
        // Predicated region
        $region17: #{tpu_custom_call.1} parent=15 // pred_check
          %p138 = pneg %p35
        $region18: #{tpu_custom_call.1} parent=15 // pred_check_branch
          %140 = sbr.rel (%p138) target = $region20
        $region19: #{tpu_custom_call.1} parent=15 // pred_region
          %s141 = sand.u32 %s25, 1
          %s142 = scalar_lea.sflag [#allocation3], %s141
          %s143 = sand.u32 %s25, 1
          %s144 = smul.addr %s143, 16
          %s145 = scalar_lea.vmem [#allocation2], %s144
          %s147 = ssub.s32 256, 256
          %148 = vsyncadd %s142, %s147
          %s149 = smul.addr %s15, 4
          %s150 = smul.addr %s149, 64
          %s151 = scalar_lea.hbm %s0, %s150
          %s152 = sshll.u32 %s145, 4
          %s153 = int_to_ptr.vmem [resolvable:$true] %s152
          %158 = dma.hbm_to_vmem [thread:$0]  %s151, 256, %s153, %s142, 128, 128, 8
        $region20: #{tpu_custom_call.1} parent=15 // pred_fallthru
          _
        // Predicated region
        $region21: #{tpu_custom_call.1} parent=15 // pred_check
          %p159 = pneg %p61
        $region22: #{tpu_custom_call.1} parent=15 // pred_check_branch
          %161 = sbr.rel (%p159) target = $region24
        $region23: #{tpu_custom_call.1} parent=15 // pred_region
          %p162 = scmp.lt.s32.totalorder %s15, 1
          %s163 = scalar_select %p162, %s15, 1
          %s164 = smul.addr %s163, 4
          %s165 = scalar_lea.vmem %s1, %s164
        $region24: #{tpu_custom_call.1} parent=15 // pred_fallthru
          _
        // Predicated region
        $region25: #{tpu_custom_call.1} parent=15 // pred_check
          %p166 = pneg %p87
        $region26: #{tpu_custom_call.1} parent=15 // pred_check_branch
          %168 = sbr.rel (%p166) target = $region28
        $region27: #{tpu_custom_call.1} parent=15 // pred_region
          %p169 = scmp.lt.s32.totalorder %s15, 1
          %s170 = scalar_select %p169, %s15, 1
          %s171 = smul.addr %s170, 4
          %s172 = scalar_lea.vmem %s2, %s171
        $region28: #{tpu_custom_call.1} parent=15 // pred_fallthru
          _
      $region16: #{tpu_custom_call.1} parent=5 // pred_fallthru
        _
      %p173 = scmp.le.s32.totalorder 1, %s15
      %p174 = scmp.lt.s32.totalorder %s15, 3
      %p175 = pnand %p173, %p174
      %p176 = pneg %p175
      // Predicated region
      $region29: #{tpu_custom_call.1} parent=5 // pred_check
        _
      $region30: #{tpu_custom_call.1} parent=5 // pred_check_branch
        %178 = sbr.rel (%p175) target = $region32
      $region31: #{tpu_custom_call.1} parent=5 // pred_region
        %s179 = ssub.s32 %s15, 1
        %s180 = sand.u32 %s28, 1
        %s181 = scalar_lea.sflag [#allocation3], %s180
        %s182 = sand.u32 %s28, 1
        %s183 = smul.addr %s182, 16
        %s184 = scalar_lea.vmem [#allocation2], %s183
        // Predicated region
        $region33: #{tpu_custom_call.1} parent=31 // pred_check
          %p185 = pneg %p41
        $region34: #{tpu_custom_call.1} parent=31 // pred_check_branch
          %187 = sbr.rel (%p185) target = $region36
        $region35: #{tpu_custom_call.1} parent=31 // pred_region
          %188 = dma.done %s181, 256
        $region36: #{tpu_custom_call.1} parent=31 // pred_fallthru
          _
        %s189 = sand.u32 %s28, 1
        %s190 = scalar_lea.sflag [#allocation3], %s189
        %s191 = sand.u32 %s28, 1
        %s192 = smul.addr %s191, 16
        %s193 = scalar_lea.vmem [#allocation2], %s192
        %p194 = pneg %p41
        %p195 = pneg %p38
        %p196 = scmp.lt.s32.totalorder %s20, 1
        %s197 = scalar_select %p196, %s20, 1
        %s198 = smul.addr %s197, 4
        %s199 = scalar_lea.vmem %s1, %s198
        %p200 = pneg %p67
        %p201 = pneg %p64
        %p202 = scmp.lt.s32.totalorder %s20, 1
        %s203 = scalar_select %p202, %s20, 1
        %s204 = smul.addr %s203, 4
        %s205 = scalar_lea.vmem %s2, %s204
        %p206 = pneg %p93
        %p207 = pneg %p90
        %p208 = pneg %p119
        %p209 = pneg %p116
        %s210 = sand.u32 %s106, 1
        %s211 = scalar_lea.sflag [#allocation4], %s210
        %s212 = sand.u32 %s106, 1
        %s213 = smul.addr %s212, 16
        %s214 = scalar_lea.vmem [#allocation5], %s213
        %p215 = scmp.lt.s32.totalorder %s20, 1
        %s216 = scalar_select %p215, %s20, 1
        %s217 = smul.addr %s216, 4
        %s218 = scalar_lea.vmem %s1, %s217
        %p219 = scmp.lt.s32.totalorder %s20, 1
        %s220 = scalar_select %p219, %s20, 1
        %s221 = smul.addr %s220, 4
        %s222 = scalar_lea.vmem %s2, %s221
        %v223 = vld [vmem:[%s184] sm:$0xff]
        %v224 = vld [vmem:[%s184 + $0x8] sm:$0xff]
        %v227 = vcombine.high %v223, %v223
        %v228 = vcombine.high %v224, %v224
        %vm231 = vcmask 1043456
        %v232 = vsel %vm231, %v223, 0.0
        %v233 = vsel %vm231, %v227, 0.0
        %v234 = vadd.f32 %v232, %v233
        %235 = vadd.xlane.f32.xlu0 %v234
        %v236 = vpop.xlane.xlu0 %235
        %v237 = vsel %vm231, %v224, 0.0
        %v238 = vsel %vm231, %v228, 0.0
        %v239 = vadd.f32 %v237, %v238
        %240 = vadd.xlane.f32.xlu0 %v239
        %v241 = vpop.xlane.xlu0 %240
        %v242 = vsel %vm231, %v236, 0.0
        %v243 = vsel %vm231, %v241, 0.0
        %v244 = vadd.f32 %v242, %v243
        %v245 = vrcp.pop 512.0
        %v246 = vmul.f32 %v244, %v245
        %v249 = vunpack.c.l.s4 839922192
        %v250 = vunpack.c.0.s8 %v249
        %v251 = vlaneseq
        %v252 = vshrl.u32 %v251, 7
        %v253 = vsub.s32 %v250, %v252
        %v254 = vrot.slane %v246, %v253
        %v256 = vsub.f32 %v223, %v254
        %v257 = vsub.f32 %v224, %v254
        %v258 = vmul.f32 %v256, %v256
        %v259 = vmul.f32 %v257, %v257
        %v262 = vcombine.high %v258, %v258
        %v263 = vcombine.high %v259, %v259
        %v266 = vsel %vm231, %v258, 0.0
        %v267 = vsel %vm231, %v262, 0.0
        %v268 = vadd.f32 %v266, %v267
        %269 = vadd.xlane.f32.xlu0 %v268
        %v270 = vpop.xlane.xlu0 %269
        %v271 = vsel %vm231, %v259, 0.0
        %v272 = vsel %vm231, %v263, 0.0
        %v273 = vadd.f32 %v271, %v272
        %274 = vadd.xlane.f32.xlu0 %v273
        %v275 = vpop.xlane.xlu0 %274
        %v276 = vsel %vm231, %v270, 0.0
        %v277 = vsel %vm231, %v275, 0.0
        %v278 = vadd.f32 %v276, %v277
        %v279 = vmul.f32 %v278, %v245
        %v280 = vld [vmem:[%s218] sm:$0xf]
        %v281 = vadd.f32 %v279, 1e-05
        %v282 = vrsqrt.pop %v281
        %v283 = vmul.f32 %v280, %v282
        %v284 = vld [vmem:[%s222] sm:$0xf]
        %286 = vset.pattern.permute.xlu0 0
        %287 = vperm.xlu0 %286, %v283
        %v288 = vpop.permute.xlu0 %287
        %v290 = vunpack.c.l.s4 839922192
        %v291 = vunpack.c.0.s8 %v290
        %v292 = vlaneseq
        %v293 = vshrl.u32 %v292, 7
        %v294 = vsub.s32 %v291, %v293
        %v295 = vrot.slane %v288, %v294
        %v297 = vmul.f32 %v256, %v295
        %v298 = vmul.f32 %v257, %v295
        %300 = vset.pattern.permute.xlu0 0
        %301 = vperm.xlu0 %300, %v284
        %v302 = vpop.permute.xlu0 %301
        %v304 = vunpack.c.l.s4 839922192
        %v305 = vunpack.c.0.s8 %v304
        %v306 = vlaneseq
        %v307 = vshrl.u32 %v306, 7
        %v308 = vsub.s32 %v305, %v307
        %v309 = vrot.slane %v302, %v308
        %v311 = vadd.f32 %v297, %v309
        %v312 = vadd.f32 %v298, %v309
        %313 = vst [vmem:[%s214] sm:$0xff] %v311
        %314 = vst [vmem:[%s214 + $0x8] sm:$0xff] %v312
        %s315 = sand.u32 %s106, 1
        %s316 = scalar_lea.sflag [#allocation4], %s315
        %s317 = sand.u32 %s106, 1
        %s318 = smul.addr %s317, 16
        %s319 = scalar_lea.vmem [#allocation5], %s318
        // Predicated region
        $region37: #{tpu_custom_call.1} parent=31 // pred_check
          %p320 = pneg %p116
        $region38: #{tpu_custom_call.1} parent=31 // pred_check_branch
          %322 = sbr.rel (%p320) target = $region40
        $region39: #{tpu_custom_call.1} parent=31 // pred_region
          %s324 = ssub.s32 256, 256
          %325 = vsyncadd %s316, %s324
          %s326 = smul.addr %s20, 4
          %s327 = smul.addr %s326, 64
          %s328 = scalar_lea.hbm %s3, %s327
          %s329 = sshll.u32 %s319, 4
          %s330 = int_to_ptr.vmem [resolvable:$true] %s329
          %335 = dma.vmem_to_hbm [thread:$0]  %s330, 256, %s328, %s316, 128, 128, 8
        $region40: #{tpu_custom_call.1} parent=31 // pred_fallthru
          _
      $region32: #{tpu_custom_call.1} parent=5 // pred_fallthru
        _
      %p336 = scmp.le.s32.totalorder 2, %s15
      // Predicated region
      $region41: #{tpu_custom_call.1} parent=5 // pred_check
        %p337 = pneg %p336
      $region42: #{tpu_custom_call.1} parent=5 // pred_check_branch
        %339 = sbr.rel (%p337) target = $region44
      $region43: #{tpu_custom_call.1} parent=5 // pred_region
        %s340 = ssub.s32 %s15, 2
        // Predicated region
        $region45: #{tpu_custom_call.1} parent=43 // pred_check
          %p341 = pneg %p122
        $region46: #{tpu_custom_call.1} parent=43 // pred_check_branch
          %343 = sbr.rel (%p341) target = $region48
        $region47: #{tpu_custom_call.1} parent=43 // pred_region
          %s344 = sand.u32 %s107, 1
          %s345 = scalar_lea.sflag [#allocation4], %s344
          %s346 = sand.u32 %s107, 1
          %s347 = smul.addr %s346, 16
          %s348 = scalar_lea.vmem [#allocation5], %s347
          %349 = dma.done %s345, 256
        $region48: #{tpu_custom_call.1} parent=43 // pred_fallthru
          _
      $region44: #{tpu_custom_call.1} parent=5 // pred_fallthru
        _
    $region6: #{tpu_custom_call.1} parent=1 // loop_footer
      %s19 = sadd.s32 1, %s15
    $region7: #{tpu_custom_call.1} parent=1 // loop_footer_branch
      %14 = sbr.rel target = $region3
    $region8: #{tpu_custom_call.1} parent=1 // loop_exit
      _
    %350 = vsyncpa [#allocation3], 1
    %s351 = scalar_lea.sflag [#allocation3], 1
    %352 = vsyncpa %s351, 1
    %353 = vsyncpa [#allocation4], 1
    %s354 = scalar_lea.sflag [#allocation4], 1
    %355 = vsyncpa %s354, 1

</llo_original>
